<compile_context>
chip_gen: v6e
topology: v6e:2x2x1
jax: 0.10.0
libtpu: 0.0.40
codegen_flags: <defaults>
</compile_context>

<pallas_src>
import functools
import math

import jax
import jax.numpy as jnp
from jax import lax
from jax.experimental import pallas as pl
from jax.experimental.pallas import tpu as pltpu


def _self_attn_kernel(x_ref, wqkv_ref, wo_ref, bqkv_ref, bo_ref, o_ref, *,
                      seq_len, fused_qkv, exp_dtype):
    """One grid step = `bb` whole batch elements of single-head attention.

    x_ref    : (bb*S, E)            bf16  activations (batch rows stacked)
    wqkv_ref : (E, 3E) or (3, E, E) bf16  pre-transposed [Wq*scale | Wk | Wv]
    wo_ref   : (E, E)               bf16  pre-transposed Wo
    bqkv_ref : (1, 3E) or (3, 1, E) f32   [bq*scale | bk | bv]
    bo_ref   : (1, E)               f32   output bias
    o_ref    : (bb*S, E)            bf16  output rows
    """
    R, E = x_ref.shape
    S = seq_len
    bb = R // S
    f32, bf16 = jnp.float32, jnp.bfloat16

    x = x_ref[...]

    # ---- QKV projections (MXU, f32 accumulation) -----------------------------
    if fused_qkv:
        # E % 128 == 0: one (R,E)x(E,3E) matmul; slices below are lane-aligned.
        qkv = lax.dot_general(
            x, wqkv_ref[...],
            dimension_numbers=(((1,), (0,)), ((), ())),
            preferred_element_type=f32) + bqkv_ref[...]
        q, k, v = qkv[:, :E], qkv[:, E:2 * E], qkv[:, 2 * E:]
    else:
        # E not 128-aligned: three separate matmuls, no cross-lane relayout.
        def _proj(idx):
            return lax.dot_general(
                x, wqkv_ref[idx],
                dimension_numbers=(((1,), (0,)), ((), ())),
                preferred_element_type=f32) + bqkv_ref[idx]
        q, k, v = _proj(0), _proj(1), _proj(2)

    q = q.reshape(bb, S, E).astype(bf16)       # softmax scale already folded in
    k = k.reshape(bb, S, E).astype(bf16)
    v = v.reshape(bb, S, E).astype(bf16)

    # ---- scaled dot-product attention ----------------------------------------
    s = lax.dot_general(                       # q . k^T, batched over bb
        q, k,
        dimension_numbers=(((2,), (2,)), ((0,), (0,))),
        preferred_element_type=f32)            # (bb, S, S) f32

    m = jnp.max(s, axis=-1, keepdims=True)     # f32 row max
    p = jnp.exp((s - m).astype(exp_dtype))     # exp <= 1; bf16 on v6e/v7x
    denom = jnp.sum(p.astype(f32), axis=-1, keepdims=True)   # f32 row sum

    ctx = lax.dot_general(                     # P @ V, batched over bb
        p.astype(bf16), v,
        dimension_numbers=(((2,), (1,)), ((0,), (0,))),
        preferred_element_type=f32)            # (bb, S, E) f32
    ctx = ctx * pl.reciprocal(denom, approx=True)   # normalize (EUP vrcp)

    # ---- output projection ----------------------------------------------------
    out = lax.dot_general(
        ctx.reshape(R, E).astype(bf16), wo_ref[...],
        dimension_numbers=(((1,), (0,)), ((), ())),
        preferred_element_type=f32) + bo_ref[...]
    o_ref[...] = out.astype(o_ref.dtype)


def _tpu_caps():
    """Chip-generation flags, physical VMEM bytes, TensorCores per chip."""
    dev = jax.devices()[0]
    kind = str(getattr(dev, "device_kind", "")).lower()
    is_v5 = "v5" in kind
    is_v7 = "v7" in kind
    try:
        vmem_phys = int(pltpu.get_tpu_info().vmem_capacity_bytes)
    except Exception:
        vmem_phys = (64 << 20) if is_v7 else (128 << 20)
    num_cores = 2 if is_v7 else 1
    return is_v5, is_v7, vmem_phys, num_cores


def self_attention(x, wq, wk, wv, wo, bq, bk, bv, bo):
    """x: (B, S, E) float32.  Returns (B, S, E) float32."""
    B, S, E = x.shape
    scale = 1.0 / math.sqrt(E)
    f32, bf16 = jnp.float32, jnp.bfloat16

    is_v5, is_v7, vmem_phys, num_cores = _tpu_caps()
    fused_qkv = (E % 128 == 0)

    # ---- one-time parameter packing (wrapper, not per grid step) -------------
    if fused_qkv:
        wqkv = jnp.concatenate([wq * scale, wk, wv], axis=0).T.astype(bf16)   # (E, 3E)
        bqkv = jnp.concatenate([bq * scale, bk, bv]).reshape(1, 3 * E).astype(f32)
        w_spec = pl.BlockSpec((E, 3 * E), lambda i: (0, 0))
        b_spec = pl.BlockSpec((1, 3 * E), lambda i: (0, 0))
    else:
        wqkv = jnp.stack([(wq * scale).T, wk.T, wv.T]).astype(bf16)           # (3, E, E)
        bqkv = jnp.stack([bq * scale, bk, bv]).reshape(3, 1, E).astype(f32)
        w_spec = pl.BlockSpec((3, E, E), lambda i: (0, 0, 0))
        b_spec = pl.BlockSpec((3, 1, E), lambda i: (0, 0, 0))

    wo_t = wo.T.astype(bf16)
    bo2 = bo.reshape(1, E).astype(f32)
    x2d = x.astype(bf16).reshape(B * S, E)

    # ---- block sizing ----------------------------------------------------------
    # Per-batch-element VMEM footprint: f32 intermediates + bf16 temporaries +
    # double-buffered bf16 input/output blocks.
    per_batch_bytes = (4 * (3 * S * E + 2 * S * S + 2 * S * E)                 # f32
                       + 2 * (2 * S * E + 3 * S * E + S * S + S * E + 2 * S * E))  # bf16
    budget = (8 << 20) if is_v7 else (20 << 20)
    bb = max(1, min(B, budget // max(per_batch_bytes, 1)))
    if num_cores >= 2 and B >= 2:
        # Keep >= num_cores grid steps so both v7x TensorCores get work.
        bb = min(bb, pl.cdiv(B, num_cores))
    if bb < B:
        sub = 8 // math.gcd(S, 8)          # bb*S must be a multiple of 8
        if bb >= sub:
            bb -= bb % sub
        else:
            bb = sub
    B_pad = pl.cdiv(B, bb) * bb
    if B_pad != B:
        x2d = jnp.pad(x2d, ((0, (B_pad - B) * S), (0, 0)))
    grid = (B_pad // bb,)

    # ---- VMEM limit per generation --------------------------------------------
    weight_bytes = 2 * (3 * E * E + E * E) + 4 * (3 * E + E)
    block_bytes = bb * per_batch_bytes + weight_bytes
    if is_v7:
        vmem_cap = 52 << 20                              # 64 MiB phys - headroom
    else:
        vmem_cap = int(min(max(vmem_phys - (16 << 20), 32 << 20), 100 << 20))
    vmem_limit = int(min(vmem_cap, max(32 << 20, 4 * block_bytes)))

    cost = pl.CostEstimate(
        flops=B_pad * (8 * S * E * E + 4 * S * S * E),
        transcendentals=B_pad * S * S,
        bytes_accessed=(2 * B_pad * S * E            # x (bf16)
                        + 2 * (3 * E * E + E * E)    # weights (bf16)
                        + 4 * (3 * E + E)            # biases (f32)
                        + 2 * B_pad * S * E),        # output (bf16)
    )

    # x input spec; extra pipelining depth on v5e when the grid is long.
    if is_v5 and grid[0] > 2:
        try:
            x_spec = pl.BlockSpec((bb * S, E), lambda i: (i, 0),
                                  pipeline_mode=pl.Buffered(3))
        except TypeError:
            x_spec = pl.BlockSpec((bb * S, E), lambda i: (i, 0))
    else:
        x_spec = pl.BlockSpec((bb * S, E), lambda i: (i, 0))

    kernel = functools.partial(_self_attn_kernel, seq_len=S,
                               fused_qkv=fused_qkv,
                               exp_dtype=f32 if is_v5 else bf16)

    out2d = pl.pallas_call(
        kernel,
        out_shape=jax.ShapeDtypeStruct((B_pad * S, E), bf16),
        grid=grid,
        in_specs=[
            x_spec,                                       # x rows
            w_spec,                                       # Wq*scale / Wk / Wv (^T)
            pl.BlockSpec((E, E), lambda i: (0, 0)),       # Wo^T
            b_spec,                                       # bq*scale / bk / bv
            pl.BlockSpec((1, E), lambda i: (0, 0)),       # out bias
        ],
        out_specs=pl.BlockSpec((bb * S, E), lambda i: (i, 0)),
        compiler_params=pltpu.CompilerParams(
            dimension_semantics=("parallel",),
            vmem_limit_bytes=vmem_limit),
        cost_estimate=cost,
    )(x2d, wqkv, wo_t, bqkv, bo2)

    out2d = out2d[: B * S].astype(x.dtype)     # drop batch padding, back to f32
    return out2d.reshape(B, S, E)


def self_attention_ref(x, wq, wk, wv, wo, bq, bk, bv, bo):
    """Pure-JAX f32 reference (mirrors torch.nn.MultiheadAttention, 1 head)."""
    E = x.shape[-1]
    q = x @ wq.T + bq
    k = x @ wk.T + bk
    v = x @ wv.T + bv
    scores = (q / math.sqrt(E)) @ jnp.swapaxes(k, -1, -2)
    attn = jax.nn.softmax(scores, axis=-1)
    ctx = attn @ v
    return ctx @ wo.T + bo


if __name__ == "__main__":
    # Small shapes consistent with the module: batch=2, seq=8, embed=32.
    B, S, E = 2, 8, 32

    key = jax.random.PRNGKey(0)
    kx, kin, kout, kbi, kbo = jax.random.split(key, 5)

    x = jax.random.normal(kx, (B, S, E), dtype=jnp.float32)

    # nn.MultiheadAttention params: in_proj_weight (3E, E), in_proj_bias (3E,),
    # out_proj.weight (E, E), out_proj.bias (E,).
    bound = 1.0 / math.sqrt(E)
    in_proj_w = jax.random.uniform(kin, (3 * E, E), minval=-bound, maxval=bound,
                                   dtype=jnp.float32)
    in_proj_b = jax.random.uniform(kbi, (3 * E,), minval=-bound, maxval=bound,
                                   dtype=jnp.float32)
    out_w = jax.random.uniform(kout, (E, E), minval=-bound, maxval=bound,
                               dtype=jnp.float32)
    out_b = jax.random.uniform(kbo, (E,), minval=-bound, maxval=bound,
                               dtype=jnp.float32)

    wq, wk, wv = in_proj_w[:E], in_proj_w[E:2 * E], in_proj_w[2 * E:]
    bq, bk, bv = in_proj_b[:E], in_proj_b[E:2 * E], in_proj_b[2 * E:]

    out = self_attention(x, wq, wk, wv, out_w, bq, bk, bv, out_b)
    out = jax.block_until_ready(out)

    ref = self_attention_ref(x, wq, wk, wv, out_w, bq, bk, bv, out_b)
    assert out.shape == x.shape
    # bf16 MXU operands / bf16 exp / bf16 output with f32 accumulation
    # -> bf16-level tolerance vs the f32 reference.
    assert jnp.allclose(out, ref, atol=5e-2, rtol=5e-2), "mismatch vs reference"

    print("KERNEL_OK")
</pallas_src>

<mosaic_0001>
module attributes {stable_mosaic.version = 11 : i64} {
  func.func @_self_attn_kernel(%arg0: i32, %arg1: memref<16x32xbf16, #tpu.memory_space<vmem>>, %arg2: memref<3x32x32xbf16, #tpu.memory_space<vmem>>, %arg3: memref<32x32xbf16, #tpu.memory_space<vmem>>, %arg4: memref<3x1x32xf32, #tpu.memory_space<vmem>>, %arg5: memref<1x32xf32, #tpu.memory_space<vmem>>, %arg6: memref<16x32xbf16, #tpu.memory_space<vmem>>) attributes {dimension_semantics = [#tpu.dimension_semantics<parallel>], iteration_bounds = array<i64: 1>, scalar_prefetch = 0 : i64, scratch_operands = 0 : i64, tpu.core_type = #tpu.core_type<tc>, window_params = [{transform_indices = @transform_0, window_bounds = array<i64: 16, 32>}, {pipeline_mode = #tpu.pipeline_mode<synchronous>, transform_indices = @transform_1, window_bounds = array<i64: 3, 32, 32>}, {pipeline_mode = #tpu.pipeline_mode<synchronous>, transform_indices = @transform_2, window_bounds = array<i64: 32, 32>}, {pipeline_mode = #tpu.pipeline_mode<synchronous>, transform_indices = @transform_3, window_bounds = array<i64: 3, 1, 32>}, {pipeline_mode = #tpu.pipeline_mode<synchronous>, transform_indices = @transform_4, window_bounds = array<i64: 1, 32>}, {transform_indices = @transform_5, window_bounds = array<i64: 16, 32>}]} {
    %c0 = arith.constant 0 : index
    %c0_0 = arith.constant 0 : index
    %0 = vector.load %arg1[%c0, %c0_0] : memref<16x32xbf16, #tpu.memory_space<vmem>>, vector<16x32xbf16>
    %c0_1 = arith.constant 0 : index
    %c0_2 = arith.constant 0 : index
    %c0_3 = arith.constant 0 : index
    %1 = vector.load %arg2[%c0_1, %c0_2, %c0_3] : memref<3x32x32xbf16, #tpu.memory_space<vmem>>, vector<1x32x32xbf16>
    %2 = vector.shape_cast %1 : vector<1x32x32xbf16> to vector<32x32xbf16>
    %cst = arith.constant dense<0.000000e+00> : vector<16x32xf32>
    %3 = tpu.matmul %0, %2, %cst {dimension_numbers = #tpu.dot_dimension_numbers<[1], [0], [0], [1], [0, 0, 1, 1], [], []>} : vector<16x32xbf16>, vector<32x32xbf16>, vector<16x32xf32> -> vector<16x32xf32>
    %c0_4 = arith.constant 0 : index
    %c0_5 = arith.constant 0 : index
    %c0_6 = arith.constant 0 : index
    %4 = vector.load %arg4[%c0_4, %c0_5, %c0_6] : memref<3x1x32xf32, #tpu.memory_space<vmem>>, vector<1x1x32xf32>
    %5 = vector.shape_cast %4 : vector<1x1x32xf32> to vector<1x32xf32>
    %6 = vector.broadcast %5 : vector<1x32xf32> to vector<16x32xf32>
    %7 = arith.addf %3, %6 : vector<16x32xf32>
    %c1 = arith.constant 1 : index
    %c0_7 = arith.constant 0 : index
    %c0_8 = arith.constant 0 : index
    %8 = vector.load %arg2[%c1, %c0_7, %c0_8] : memref<3x32x32xbf16, #tpu.memory_space<vmem>>, vector<1x32x32xbf16>
    %9 = vector.shape_cast %8 : vector<1x32x32xbf16> to vector<32x32xbf16>
    %cst_9 = arith.constant dense<0.000000e+00> : vector<16x32xf32>
    %10 = tpu.matmul %0, %9, %cst_9 {dimension_numbers = #tpu.dot_dimension_numbers<[1], [0], [0], [1], [0, 0, 1, 1], [], []>} : vector<16x32xbf16>, vector<32x32xbf16>, vector<16x32xf32> -> vector<16x32xf32>
    %c1_10 = arith.constant 1 : index
    %c0_11 = arith.constant 0 : index
    %c0_12 = arith.constant 0 : index
    %11 = vector.load %arg4[%c1_10, %c0_11, %c0_12] : memref<3x1x32xf32, #tpu.memory_space<vmem>>, vector<1x1x32xf32>
    %12 = vector.shape_cast %11 : vector<1x1x32xf32> to vector<1x32xf32>
    %13 = vector.broadcast %12 : vector<1x32xf32> to vector<16x32xf32>
    %14 = arith.addf %10, %13 : vector<16x32xf32>
    %c2 = arith.constant 2 : index
    %c0_13 = arith.constant 0 : index
    %c0_14 = arith.constant 0 : index
    %15 = vector.load %arg2[%c2, %c0_13, %c0_14] : memref<3x32x32xbf16, #tpu.memory_space<vmem>>, vector<1x32x32xbf16>
    %16 = vector.shape_cast %15 : vector<1x32x32xbf16> to vector<32x32xbf16>
    %cst_15 = arith.constant dense<0.000000e+00> : vector<16x32xf32>
    %17 = tpu.matmul %0, %16, %cst_15 {dimension_numbers = #tpu.dot_dimension_numbers<[1], [0], [0], [1], [0, 0, 1, 1], [], []>} : vector<16x32xbf16>, vector<32x32xbf16>, vector<16x32xf32> -> vector<16x32xf32>
    %c2_16 = arith.constant 2 : index
    %c0_17 = arith.constant 0 : index
    %c0_18 = arith.constant 0 : index
    %18 = vector.load %arg4[%c2_16, %c0_17, %c0_18] : memref<3x1x32xf32, #tpu.memory_space<vmem>>, vector<1x1x32xf32>
    %19 = vector.shape_cast %18 : vector<1x1x32xf32> to vector<1x32xf32>
    %20 = vector.broadcast %19 : vector<1x32xf32> to vector<16x32xf32>
    %21 = arith.addf %17, %20 : vector<16x32xf32>
    %22 = vector.shape_cast %7 : vector<16x32xf32> to vector<2x8x32xf32>
    %23 = arith.truncf %22 : vector<2x8x32xf32> to vector<2x8x32xbf16>
    %24 = vector.shape_cast %14 : vector<16x32xf32> to vector<2x8x32xf32>
    %25 = arith.truncf %24 : vector<2x8x32xf32> to vector<2x8x32xbf16>
    %26 = vector.shape_cast %21 : vector<16x32xf32> to vector<2x8x32xf32>
    %27 = arith.truncf %26 : vector<2x8x32xf32> to vector<2x8x32xbf16>
    %cst_19 = arith.constant dense<0.000000e+00> : vector<2x8x8xf32>
    %28 = tpu.matmul %23, %25, %cst_19 {dimension_numbers = #tpu.dot_dimension_numbers<[2], [2], [1], [1], [0, 0, 0, 1, 1, 1], [0], [0]>} : vector<2x8x32xbf16>, vector<2x8x32xbf16>, vector<2x8x8xf32> -> vector<2x8x8xf32>
    %cst_20 = arith.constant dense<0xFF800000> : vector<2x8xf32>
    %29 = vector.multi_reduction <maximumf>, %28, %cst_20 [2] : vector<2x8x8xf32> to vector<2x8xf32>
    %30 = vector.shape_cast %29 : vector<2x8xf32> to vector<2x8x1xf32>
    %31 = vector.broadcast %30 : vector<2x8x1xf32> to vector<2x8x8xf32>
    %32 = arith.subf %28, %31 : vector<2x8x8xf32>
    %33 = arith.truncf %32 : vector<2x8x8xf32> to vector<2x8x8xbf16>
    %34 = math.exp %33 : vector<2x8x8xbf16>
    %35 = arith.extf %34 : vector<2x8x8xbf16> to vector<2x8x8xf32>
    %cst_21 = arith.constant dense<0.000000e+00> : vector<2x8xf32>
    %36 = vector.multi_reduction <add>, %35, %cst_21 [2] : vector<2x8x8xf32> to vector<2x8xf32>
    %37 = vector.shape_cast %36 : vector<2x8xf32> to vector<2x8x1xf32>
    %cst_22 = arith.constant dense<0.000000e+00> : vector<2x8x32xf32>
    %38 = tpu.matmul %34, %27, %cst_22 {dimension_numbers = #tpu.dot_dimension_numbers<[2], [1], [1], [2], [0, 0, 0, 1, 1, 2], [0], [0]>} : vector<2x8x8xbf16>, vector<2x8x32xbf16>, vector<2x8x32xf32> -> vector<2x8x32xf32>
    %39 = tpu.reciprocal %37 {approx = true} : vector<2x8x1xf32> -> vector<2x8x1xf32>
    %40 = vector.broadcast %39 : vector<2x8x1xf32> to vector<2x8x32xf32>
    %41 = arith.mulf %38, %40 : vector<2x8x32xf32>
    %42 = vector.shape_cast %41 : vector<2x8x32xf32> to vector<16x32xf32>
    %43 = arith.truncf %42 : vector<16x32xf32> to vector<16x32xbf16>
    %c0_23 = arith.constant 0 : index
    %c0_24 = arith.constant 0 : index
    %44 = vector.load %arg3[%c0_23, %c0_24] : memref<32x32xbf16, #tpu.memory_space<vmem>>, vector<32x32xbf16>
    %cst_25 = arith.constant dense<0.000000e+00> : vector<16x32xf32>
    %45 = tpu.matmul %43, %44, %cst_25 {dimension_numbers = #tpu.dot_dimension_numbers<[1], [0], [0], [1], [0, 0, 1, 1], [], []>} : vector<16x32xbf16>, vector<32x32xbf16>, vector<16x32xf32> -> vector<16x32xf32>
    %c0_26 = arith.constant 0 : index
    %c0_27 = arith.constant 0 : index
    %46 = vector.load %arg5[%c0_26, %c0_27] : memref<1x32xf32, #tpu.memory_space<vmem>>, vector<1x32xf32>
    %47 = vector.broadcast %46 : vector<1x32xf32> to vector<16x32xf32>
    %48 = arith.addf %45, %47 : vector<16x32xf32>
    %49 = arith.truncf %48 : vector<16x32xf32> to vector<16x32xbf16>
    %c0_28 = arith.constant 0 : index
    %c0_29 = arith.constant 0 : index
    %50 = vector.load %arg6[%c0_28, %c0_29] : memref<16x32xbf16, #tpu.memory_space<vmem>>, vector<16x32xbf16>
    tpu.vector_store %arg6[%c0_28, %c0_29], %49 {strides = array<i32>} : memref<16x32xbf16, #tpu.memory_space<vmem>>, vector<16x32xbf16>,
    return
  }
  func.func @transform_0(%arg0: i32) -> (i32, i32) {
    %c0_i32 = arith.constant 0 : i32
    %c0_i32_0 = arith.constant 0 : i32
    return %arg0, %c0_i32 : i32, i32
  }
  func.func @transform_1(%arg0: i32) -> (i32, i32, i32) {
    %c0_i32 = arith.constant 0 : i32
    %c0_i32_0 = arith.constant 0 : i32
    %c0_i32_1 = arith.constant 0 : i32
    %c0_i32_2 = arith.constant 0 : i32
    return %c0_i32, %c0_i32_0, %c0_i32_1 : i32, i32, i32
  }
  func.func @transform_2(%arg0: i32) -> (i32, i32) {
    %c0_i32 = arith.constant 0 : i32
    %c0_i32_0 = arith.constant 0 : i32
    %c0_i32_1 = arith.constant 0 : i32
    return %c0_i32, %c0_i32_0 : i32, i32
  }
  func.func @transform_3(%arg0: i32) -> (i32, i32, i32) {
    %c0_i32 = arith.constant 0 : i32
    %c0_i32_0 = arith.constant 0 : i32
    %c0_i32_1 = arith.constant 0 : i32
    %c0_i32_2 = arith.constant 0 : i32
    return %c0_i32, %c0_i32_0, %c0_i32_1 : i32, i32, i32
  }
  func.func @transform_4(%arg0: i32) -> (i32, i32) {
    %c0_i32 = arith.constant 0 : i32
    %c0_i32_0 = arith.constant 0 : i32
    %c0_i32_1 = arith.constant 0 : i32
    return %c0_i32, %c0_i32_0 : i32, i32
  }
  func.func @transform_5(%arg0: i32) -> (i32, i32) {
    %c0_i32 = arith.constant 0 : i32
    %c0_i32_0 = arith.constant 0 : i32
    return %arg0, %c0_i32 : i32, i32
  }
}

</mosaic_0001>

<llo_original>
// kernel: tpu_custom_call.1
$region0: #{tpu_custom_call.1}
  #allocation0 [shape = 'u32[]', space=smem, size = 0x4, offset = 0x4, fixed_abs, tag = 'smem constant byte address 0x4 - core index']
  #allocation1 [shape = 'u32[144,128]{1,0:T(1,128)}', space=vmem, size = 0x12000, scoped, tag = 'internal scratch']
  %s0 = inlined_call_operand.hbm [shape: bf16[16,32], index: 0, kind: input, shape index: {}]
  %s1 = inlined_call_operand.hbm [shape: bf16[3,32,32], index: 1, kind: input, shape index: {}]
  %s2 = inlined_call_operand.hbm [shape: bf16[32,32], index: 2, kind: input, shape index: {}]
  %s3 = inlined_call_operand.vmem [shape: f32[3,1,32], index: 3, kind: input, shape index: {}]
  %s4 = inlined_call_operand.vmem [shape: f32[1,32], index: 4, kind: input, shape index: {}]
  %s5 = inlined_call_operand.hbm [shape: bf16[16,32], index: 5, kind: output, shape index: {}]
  %s6 = sld [smem:[#allocation0]]
  $region42: #{tpu_custom_call.1} parent=0
    _
  %s8 = ssub.s32 1, %s6
  %s9 = scalar_select 0, %s8, %s6
  $region1: #{tpu_custom_call.1} parent=0
    #allocation2 [shape = 'u8[4096]{0}', space=vmem, size = 0x1000, scoped, tag = 'input window, operand 0, single buffered']
    #allocation3 [shape = 's32[1]{0}', space=sflag, size = 0x4, scoped, tag = 'scoped memory for tpu_custom_call.1']
    #allocation4 [shape = 's32[1]{0}', space=sflag, size = 0x4, scoped, tag = 'scoped memory for tpu_custom_call.1']
    #allocation5 [shape = 'u8[24576]{0}', space=vmem, size = 0x6000, scoped, tag = 'input window, operand 1, single buffered']
    #allocation6 [shape = 's32[1]{0}', space=sflag, size = 0x4, scoped, tag = 'scoped memory for tpu_custom_call.1']
    #allocation7 [shape = 'u8[8192]{0}', space=vmem, size = 0x2000, scoped, tag = 'input window, operand 2, single buffered']
    #allocation8 [shape = 'u8[4096]{0}', space=vmem, size = 0x1000, scoped, tag = 'output window, operand 0, single buffered']
    %10 = vsyncpa [#allocation3], 0
    %11 = vsyncpa [#allocation6], 0
    %12 = vsyncpa [#allocation4], 0
    // Predicated region
    $region2: #{tpu_custom_call.1} parent=1 // pred_check
      _
    $region3: #{tpu_custom_call.1} parent=1 // pred_check_branch
      %14 = sbr.rel (0) target = $region5
    $region4: #{tpu_custom_call.1} parent=1 // pred_region
      %s16 = ssub.s32 128, 128
      %17 = vsyncadd [#allocation3], %s16
      %s18 = sshll.u32 [#allocation2], 4
      %s19 = int_to_ptr.vmem [resolvable:$true] %s18
      %24 = dma.hbm_to_vmem [thread:$0]  %s0, 128, %s19, [#allocation3], 64, 64, 4
    $region5: #{tpu_custom_call.1} parent=1 // pred_fallthru
      _
    // Predicated region
    $region6: #{tpu_custom_call.1} parent=1 // pred_check
      _
    $region7: #{tpu_custom_call.1} parent=1 // pred_check_branch
      %26 = sbr.rel (0) target = $region9
    $region8: #{tpu_custom_call.1} parent=1 // pred_region
      %s28 = ssub.s32 768, 768
      %29 = vsyncadd [#allocation6], %s28
      %s30 = sshll.u32 [#allocation5], 4
      %s31 = int_to_ptr.vmem [resolvable:$true] %s30
      %36 = dma.hbm_to_vmem [thread:$0]  %s1, 768, %s31, [#allocation6], 64, 64, 4
    $region9: #{tpu_custom_call.1} parent=1 // pred_fallthru
      _
    // Predicated region
    $region10: #{tpu_custom_call.1} parent=1 // pred_check
      _
    $region11: #{tpu_custom_call.1} parent=1 // pred_check_branch
      %38 = sbr.rel (0) target = $region13
    $region12: #{tpu_custom_call.1} parent=1 // pred_region
      %s40 = ssub.s32 256, 256
      %41 = vsyncadd [#allocation6], %s40
      %s42 = sshll.u32 [#allocation7], 4
      %s43 = int_to_ptr.vmem [resolvable:$true] %s42
      %48 = dma.hbm_to_vmem [thread:$0]  %s2, 256, %s43, [#allocation6], 64, 64, 4
    $region13: #{tpu_custom_call.1} parent=1 // pred_fallthru
      _
    // Predicated region
    $region14: #{tpu_custom_call.1} parent=1 // pred_check
      _
    $region15: #{tpu_custom_call.1} parent=1 // pred_check_branch
      %50 = sbr.rel (0) target = $region17
    $region16: #{tpu_custom_call.1} parent=1 // pred_region
      _
    $region17: #{tpu_custom_call.1} parent=1 // pred_fallthru
      _
    // Predicated region
    $region18: #{tpu_custom_call.1} parent=1 // pred_check
      _
    $region19: #{tpu_custom_call.1} parent=1 // pred_check_branch
      %52 = sbr.rel (0) target = $region21
    $region20: #{tpu_custom_call.1} parent=1 // pred_region
      _
    $region21: #{tpu_custom_call.1} parent=1 // pred_fallthru
      _
    // Predicated region
    $region22: #{tpu_custom_call.1} parent=1 // pred_check
      _
    $region23: #{tpu_custom_call.1} parent=1 // pred_check_branch
      %54 = sbr.rel (0) target = $region25
    $region24: #{tpu_custom_call.1} parent=1 // pred_region
      %55 = dma.done [#allocation3], 128
    $region25: #{tpu_custom_call.1} parent=1 // pred_fallthru
      _
    // Predicated region
    $region26: #{tpu_custom_call.1} parent=1 // pred_check
      _
    $region27: #{tpu_custom_call.1} parent=1 // pred_check_branch
      %57 = sbr.rel (0) target = $region29
    $region28: #{tpu_custom_call.1} parent=1 // pred_region
      %58 = dma.done [#allocation6], 768
    $region29: #{tpu_custom_call.1} parent=1 // pred_fallthru
      _
    // Predicated region
    $region30: #{tpu_custom_call.1} parent=1 // pred_check
      _
    $region31: #{tpu_custom_call.1} parent=1 // pred_check_branch
      %60 = sbr.rel (0) target = $region33
    $region32: #{tpu_custom_call.1} parent=1 // pred_region
      %61 = dma.done [#allocation6], 256
    $region33: #{tpu_custom_call.1} parent=1 // pred_fallthru
      _
    %v63 = vld [vmem:[#allocation2] sm:$0xf]
    %v64 = vld [vmem:[#allocation2 + $0x4] sm:$0xf]
    %v65 = vld [vmem:[#allocation5] sm:$0xf]
    %v66 = vld [vmem:[#allocation5 + $0x4] sm:$0xf]
    %v67 = vld [vmem:[#allocation5 + $0x8] sm:$0xf]
    %v68 = vld [vmem:[#allocation5 + $0xc] sm:$0xf]
    %v69 = vld [vmem:[%s3] sm:$0x1]
    %v71 = vlaneseq
    %v72 = vshrl.u32 %v71, 7
    %v73 = vsub.s32 0, %v72
    %v74 = vrot.slane %v69, %v73
    %v78 = vunpack.c.l.b16 %v63
    %v79 = vunpack.c.l.b16 %v64
    %v80 = vpack.c.b16 %v79, %v78
    %v85 = vunpack.c.l.b16 %v65
    %v86 = vunpack.c.l.b16 %v66
    %v87 = vunpack.c.l.b16 %v67
    %v88 = vunpack.c.l.b16 %v68
    %v89 = vpack.c.b16 %v86, %v85
    %v90 = vpack.c.b16 %v88, %v87
    %vm93 = vcmask 261120
    %v95 = vsel %vm93, %v80, 0
    %97 = vmatprep.subr.bf16.mxu0 0
    %98 = vmatpush1.bf16.msra.mxu0 0
    %99 = vmatprep.subr.bf16.mxu0 0
    %100 = vmatpush1.bf16.msra.mxu0 0
    %101 = vmatprep.subr.bf16.mxu0 0
    %102 = vmatpush1.bf16.msra.mxu0 0
    %103 = vmatprep.subr.bf16.mxu0 0
    %104 = vmatpush1.bf16.msra.mxu0 0
    %105 = vmatprep.subr.bf16.mxu0 0
    %106 = vmatpush1.bf16.msra.mxu0 0
    %107 = vmatprep.subr.bf16.mxu0 0
    %108 = vmatpush1.bf16.msra.mxu0 0
    %109 = vmatprep.subr.bf16.mxu0 0
    %110 = vmatpush1.bf16.msra.mxu0 %v90
    %111 = vmatprep.subr.bf16.mxu0 0
    %112 = vmatpush1.bf16.msra.mxu0 %v89
    %113 = vmatprep.subr.bf16.mxu0 0
    %114 = vmatpush2.bf16.msra.mxu0 0
    %115 = vmatprep.subr.bf16.mxu0 0
    %116 = vmatpush2.bf16.msra.mxu0 0
    %117 = vmatprep.subr.bf16.mxu0 0
    %118 = vmatpush2.bf16.msra.mxu0 0
    %119 = vmatprep.subr.bf16.mxu0 0
    %120 = vmatpush2.bf16.msra.mxu0 0
    %121 = vmatprep.subr.bf16.mxu0 0
    %122 = vmatpush2.bf16.msra.mxu0 0
    %123 = vmatprep.subr.bf16.mxu0 0
    %124 = vmatpush2.bf16.msra.mxu0 0
    %125 = vmatprep.subr.bf16.mxu0 0
    %126 = vmatpush2.bf16.msra.mxu0 0
    %127 = vmatprep.subr.bf16.mxu0 0
    %128 = vmatpush2.bf16.msra.mxu0 0
    %129 = vmatprep.mubr.bf16.mxu0 0
    %130 = vmatmul.mubr.bf16.gmra.mxu0 %v95
    %v131 = vpop.f32.mrf.mxu0
    %v132 = vadd.f32 %v74, %v131
    %v133 = vpop.f32.mrf.mxu0
    %v134 = vpop.f32.mrf.mxu0
    %v135 = vadd.f32 %v74, %v134
    %v136 = vpop.f32.mrf.mxu0
    %137 = vdwg.mxu0
    %s138 = scalar_lea.vmem [#allocation5], 16
    %v139 = vld [vmem:[%s138] sm:$0xf]
    %v140 = vld [vmem:[%s138 + $0x4] sm:$0xf]
    %v141 = vld [vmem:[%s138 + $0x8] sm:$0xf]
    %v142 = vld [vmem:[%s138 + $0xc] sm:$0xf]
    %s143 = scalar_lea.vmem %s3, 1
    %v144 = vld [vmem:[%s143] sm:$0x1]
    %v146 = vlaneseq
    %v147 = vshrl.u32 %v146, 7
    %v148 = vsub.s32 0, %v147
    %v149 = vrot.slane %v144, %v148
    %v155 = vunpack.c.l.b16 %v139
    %v156 = vunpack.c.l.b16 %v140
    %v157 = vunpack.c.l.b16 %v141
    %v158 = vunpack.c.l.b16 %v142
    %v159 = vpack.c.b16 %v156, %v155
    %v160 = vpack.c.b16 %v158, %v157
    %163 = vmatprep.subr.bf16.mxu0 0
    %164 = vmatpush1.bf16.msra.mxu0 0
    %165 = vmatprep.subr.bf16.mxu0 0
    %166 = vmatpush1.bf16.msra.mxu0 0
    %167 = vmatprep.subr.bf16.mxu0 0
    %168 = vmatpush1.bf16.msra.mxu0 0
    %169 = vmatprep.subr.bf16.mxu0 0
    %170 = vmatpush1.bf16.msra.mxu0 0
    %171 = vmatprep.subr.bf16.mxu0 0
    %172 = vmatpush1.bf16.msra.mxu0 0
    %173 = vmatprep.subr.bf16.mxu0 0
    %174 = vmatpush1.bf16.msra.mxu0 0
    %175 = vmatprep.subr.bf16.mxu0 0
    %176 = vmatpush1.bf16.msra.mxu0 %v160
    %177 = vmatprep.subr.bf16.mxu0 0
    %178 = vmatpush1.bf16.msra.mxu0 %v159
    %179 = vmatprep.subr.bf16.mxu0 0
    %180 = vmatpush2.bf16.msra.mxu0 0
    %181 = vmatprep.subr.bf16.mxu0 0
    %182 = vmatpush2.bf16.msra.mxu0 0
    %183 = vmatprep.subr.bf16.mxu0 0
    %184 = vmatpush2.bf16.msra.mxu0 0
    %185 = vmatprep.subr.bf16.mxu0 0
    %186 = vmatpush2.bf16.msra.mxu0 0
    %187 = vmatprep.subr.bf16.mxu0 0
    %188 = vmatpush2.bf16.msra.mxu0 0
    %189 = vmatprep.subr.bf16.mxu0 0
    %190 = vmatpush2.bf16.msra.mxu0 0
    %191 = vmatprep.subr.bf16.mxu0 0
    %192 = vmatpush2.bf16.msra.mxu0 0
    %193 = vmatprep.subr.bf16.mxu0 0
    %194 = vmatpush2.bf16.msra.mxu0 0
    %195 = vmatprep.mubr.bf16.mxu0 0
    %196 = vmatmul.mubr.bf16.gmra.mxu0 %v95
    %v197 = vpop.f32.mrf.mxu0
    %v198 = vadd.f32 %v149, %v197
    %v199 = vpop.f32.mrf.mxu0
    %v200 = vpop.f32.mrf.mxu0
    %v201 = vadd.f32 %v149, %v200
    %v202 = vpop.f32.mrf.mxu0
    %203 = vdwg.mxu0
    %s204 = scalar_lea.vmem [#allocation5], 32
    %v205 = vld [vmem:[%s204] sm:$0xf]
    %v206 = vld [vmem:[%s204 + $0x4] sm:$0xf]
    %v207 = vld [vmem:[%s204 + $0x8] sm:$0xf]
    %v208 = vld [vmem:[%s204 + $0xc] sm:$0xf]
    %s209 = scalar_lea.vmem %s3, 2
    %v210 = vld [vmem:[%s209] sm:$0x1]
    %v212 = vlaneseq
    %v213 = vshrl.u32 %v212, 7
    %v214 = vsub.s32 0, %v213
    %v215 = vrot.slane %v210, %v214
    %v221 = vunpack.c.l.b16 %v205
    %v222 = vunpack.c.l.b16 %v206
    %v223 = vunpack.c.l.b16 %v207
    %v224 = vunpack.c.l.b16 %v208
    %v225 = vpack.c.b16 %v222, %v221
    %v226 = vpack.c.b16 %v224, %v223
    %229 = vmatprep.subr.bf16.mxu0 0
    %230 = vmatpush1.bf16.msra.mxu0 0
    %231 = vmatprep.subr.bf16.mxu0 0
    %232 = vmatpush1.bf16.msra.mxu0 0
    %233 = vmatprep.subr.bf16.mxu0 0
    %234 = vmatpush1.bf16.msra.mxu0 0
    %235 = vmatprep.subr.bf16.mxu0 0
    %236 = vmatpush1.bf16.msra.mxu0 0
    %237 = vmatprep.subr.bf16.mxu0 0
    %238 = vmatpush1.bf16.msra.mxu0 0
    %239 = vmatprep.subr.bf16.mxu0 0
    %240 = vmatpush1.bf16.msra.mxu0 0
    %241 = vmatprep.subr.bf16.mxu0 0
    %242 = vmatpush1.bf16.msra.mxu0 %v226
    %243 = vmatprep.subr.bf16.mxu0 0
    %244 = vmatpush1.bf16.msra.mxu0 %v225
    %245 = vmatprep.subr.bf16.mxu0 0
    %246 = vmatpush2.bf16.msra.mxu0 0
    %247 = vmatprep.subr.bf16.mxu0 0
    %248 = vmatpush2.bf16.msra.mxu0 0
    %249 = vmatprep.subr.bf16.mxu0 0
    %250 = vmatpush2.bf16.msra.mxu0 0
    %251 = vmatprep.subr.bf16.mxu0 0
    %252 = vmatpush2.bf16.msra.mxu0 0
    %253 = vmatprep.subr.bf16.mxu0 0
    %254 = vmatpush2.bf16.msra.mxu0 0
    %255 = vmatprep.subr.bf16.mxu0 0
    %256 = vmatpush2.bf16.msra.mxu0 0
    %257 = vmatprep.subr.bf16.mxu0 0
    %258 = vmatpush2.bf16.msra.mxu0 0
    %259 = vmatprep.subr.bf16.mxu0 0
    %260 = vmatpush2.bf16.msra.mxu0 0
    %261 = vmatprep.mubr.bf16.mxu0 0
    %262 = vmatmul.mubr.bf16.gmra.mxu0 %v95
    %v263 = vpop.f32.mrf.mxu0
    %v264 = vadd.f32 %v215, %v263
    %v265 = vpop.f32.mrf.mxu0
    %v266 = vpop.f32.mrf.mxu0
    %v267 = vadd.f32 %v215, %v266
    %v268 = vpop.f32.mrf.mxu0
    %269 = vdwg.mxu0
    %v270 = vpack.c.bf16 %v132, %v132
    %v271 = vpack.c.bf16 %v135, %v135
    %v272 = vpack.c.bf16 %v198, %v198
    %v273 = vpack.c.bf16 %v201, %v201
    %v274 = vpack.c.bf16 %v264, %v264
    %v275 = vpack.c.bf16 %v267, %v267
    %v277 = vsel %vm93, %v270, 0
    %v280 = vsel %vm93, %v272, 0
    %282 = vmatprep.subr.bf16.mxu0 0
    %283 = vmatpush1.bf16.xpose.msra.mxu0 0
    %284 = vmatprep.subr.bf16.mxu0 0
    %285 = vmatpush1.bf16.xpose.msra.mxu0 0
    %286 = vmatprep.subr.bf16.mxu0 0
    %287 = vmatpush1.bf16.xpose.msra.mxu0 0
    %288 = vmatprep.subr.bf16.mxu0 0
    %289 = vmatpush1.bf16.xpose.msra.mxu0 0
    %290 = vmatprep.subr.bf16.mxu0 0
    %291 = vmatpush1.bf16.xpose.msra.mxu0 0
    %292 = vmatprep.subr.bf16.mxu0 0
    %293 = vmatpush1.bf16.xpose.msra.mxu0 0
    %294 = vmatprep.subr.bf16.mxu0 0
    %295 = vmatpush1.bf16.xpose.msra.mxu0 0
    %296 = vmatprep.subr.bf16.mxu0 0
    %297 = vmatpush1.bf16.xpose.msra.mxu0 %v280
    %298 = vmatprep.subr.bf16.mxu0 0
    %299 = vmatpush2.bf16.xpose.msra.mxu0 0
    %300 = vmatprep.subr.bf16.mxu0 0
    %301 = vmatpush2.bf16.xpose.msra.mxu0 0
    %302 = vmatprep.subr.bf16.mxu0 0
    %303 = vmatpush2.bf16.xpose.msra.mxu0 0
    %304 = vmatprep.subr.bf16.mxu0 0
    %305 = vmatpush2.bf16.xpose.msra.mxu0 0
    %306 = vmatprep.subr.bf16.mxu0 0
    %307 = vmatpush2.bf16.xpose.msra.mxu0 0
    %308 = vmatprep.subr.bf16.mxu0 0
    %309 = vmatpush2.bf16.xpose.msra.mxu0 0
    %310 = vmatprep.subr.bf16.mxu0 0
    %311 = vmatpush2.bf16.xpose.msra.mxu0 0
    %312 = vmatprep.subr.bf16.mxu0 0
    %313 = vmatpush2.bf16.xpose.msra.mxu0 0
    %314 = vmatprep.mubr.bf16.mxu0 0
    %315 = vmatmul.mubr.bf16.gmra.mxu0 %v277
    %v316 = vpop.f32.mrf.mxu0
    %v317 = vadd.f32 0.0, %v316
    %v318 = vpop.f32.mrf.mxu0
    %v319 = vpop.f32.mrf.mxu0
    %v320 = vpop.f32.mrf.mxu0
    %321 = vdwg.mxu0
    %v323 = vsel %vm93, %v271, 0
    %v326 = vsel %vm93, %v273, 0
    %328 = vmatprep.subr.bf16.mxu0 0
    %329 = vmatpush1.bf16.xpose.msra.mxu0 0
    %330 = vmatprep.subr.bf16.mxu0 0
    %331 = vmatpush1.bf16.xpose.msra.mxu0 0
    %332 = vmatprep.subr.bf16.mxu0 0
    %333 = vmatpush1.bf16.xpose.msra.mxu0 0
    %334 = vmatprep.subr.bf16.mxu0 0
    %335 = vmatpush1.bf16.xpose.msra.mxu0 0
    %336 = vmatprep.subr.bf16.mxu0 0
    %337 = vmatpush1.bf16.xpose.msra.mxu0 0
    %338 = vmatprep.subr.bf16.mxu0 0
    %339 = vmatpush1.bf16.xpose.msra.mxu0 0
    %340 = vmatprep.subr.bf16.mxu0 0
    %341 = vmatpush1.bf16.xpose.msra.mxu0 0
    %342 = vmatprep.subr.bf16.mxu0 0
    %343 = vmatpush1.bf16.xpose.msra.mxu0 %v326
    %344 = vmatprep.subr.bf16.mxu0 0
    %345 = vmatpush2.bf16.xpose.msra.mxu0 0
    %346 = vmatprep.subr.bf16.mxu0 0
    %347 = vmatpush2.bf16.xpose.msra.mxu0 0
    %348 = vmatprep.subr.bf16.mxu0 0
    %349 = vmatpush2.bf16.xpose.msra.mxu0 0
    %350 = vmatprep.subr.bf16.mxu0 0
    %351 = vmatpush2.bf16.xpose.msra.mxu0 0
    %352 = vmatprep.subr.bf16.mxu0 0
    %353 = vmatpush2.bf16.xpose.msra.mxu0 0
    %354 = vmatprep.subr.bf16.mxu0 0
    %355 = vmatpush2.bf16.xpose.msra.mxu0 0
    %356 = vmatprep.subr.bf16.mxu0 0
    %357 = vmatpush2.bf16.xpose.msra.mxu0 0
    %358 = vmatprep.subr.bf16.mxu0 0
    %359 = vmatpush2.bf16.xpose.msra.mxu0 0
    %360 = vmatprep.mubr.bf16.mxu0 0
    %361 = vmatmul.mubr.bf16.gmra.mxu0 %v323
    %v362 = vpop.f32.mrf.mxu0
    %v363 = vadd.f32 0.0, %v362
    %v364 = vpop.f32.mrf.mxu0
    %v365 = vpop.f32.mrf.mxu0
    %v366 = vpop.f32.mrf.mxu0
    %367 = vdwg.mxu0
    %vm368 = vcmask 64512
    %v369 = vsel %vm368, %v317, -inf
    %370 = vmax.xlane.f32.xlu0 %v369
    %v371 = vpop.xlane.xlu0 %370
    %v372 = vsel %vm368, %v363, -inf
    %373 = vmax.xlane.f32.xlu0 %v372
    %v374 = vpop.xlane.xlu0 %373
    %v375 = vsub.f32 %v317, %v371
    %v376 = vsub.f32 %v363, %v374
    %v377 = vpack.c.bf16 %v375, %v375
    %v378 = vpack.c.bf16 %v376, %v376
    %v380 = vmul.bf16 %v377, 1069105081
    %v381 = vpow.bf16.pop %v380
    %v383 = vmul.bf16 %v378, 1069105081
    %v384 = vpow.bf16.pop %v383
    %v385 = vunpack.c.l.bf16 %v381
    %v386 = vunpack.c.l.bf16 %v384
    %v387 = vsel %vm368, %v385, 0.0
    %388 = vadd.xlane.f32.xlu0 %v387
    %v389 = vpop.xlane.xlu0 %388
    %v390 = vsel %vm368, %v386, 0.0
    %391 = vadd.xlane.f32.xlu0 %v390
    %v392 = vpop.xlane.xlu0 %391
    %v394 = vsel %vm368, %v381, 0
    %vm396 = vcmask 1043456
    %v398 = vsel %vm396, %v274, 0
    %400 = vmatprep.subr.bf16.mxu0 0
    %401 = vmatpush1.bf16.msra.mxu0 0
    %402 = vmatprep.subr.bf16.mxu0 0
    %403 = vmatpush1.bf16.msra.mxu0 0
    %404 = vmatprep.subr.bf16.mxu0 0
    %405 = vmatpush1.bf16.msra.mxu0 0
    %406 = vmatprep.subr.bf16.mxu0 0
    %407 = vmatpush1.bf16.msra.mxu0 0
    %408 = vmatprep.subr.bf16.mxu0 0
    %409 = vmatpush1.bf16.msra.mxu0 0
    %410 = vmatprep.subr.bf16.mxu0 0
    %411 = vmatpush1.bf16.msra.mxu0 0
    %412 = vmatprep.subr.bf16.mxu0 0
    %413 = vmatpush1.bf16.msra.mxu0 0
    %414 = vmatprep.subr.bf16.mxu0 0
    %415 = vmatpush1.bf16.msra.mxu0 %v398
    %416 = vmatprep.subr.bf16.mxu0 0
    %417 = vmatpush2.bf16.msra.mxu0 0
    %418 = vmatprep.subr.bf16.mxu0 0
    %419 = vmatpush2.bf16.msra.mxu0 0
    %420 = vmatprep.subr.bf16.mxu0 0
    %421 = vmatpush2.bf16.msra.mxu0 0
    %422 = vmatprep.subr.bf16.mxu0 0
    %423 = vmatpush2.bf16.msra.mxu0 0
    %424 = vmatprep.subr.bf16.mxu0 0
    %425 = vmatpush2.bf16.msra.mxu0 0
    %426 = vmatprep.subr.bf16.mxu0 0
    %427 = vmatpush2.bf16.msra.mxu0 0
    %428 = vmatprep.subr.bf16.mxu0 0
    %429 = vmatpush2.bf16.msra.mxu0 0
    %430 = vmatprep.subr.bf16.mxu0 0
    %431 = vmatpush2.bf16.msra.mxu0 0
    %432 = vmatprep.mubr.bf16.mxu0 0
    %433 = vmatmul.mubr.bf16.gmra.mxu0 %v394
    %v434 = vpop.f32.mrf.mxu0
    %v435 = vadd.f32 0.0, %v434
    %v436 = vpop.f32.mrf.mxu0
    %v437 = vpop.f32.mrf.mxu0
    %v438 = vpop.f32.mrf.mxu0
    %439 = vdwg.mxu0
    %v441 = vsel %vm368, %v384, 0
    %v444 = vsel %vm396, %v275, 0
    %446 = vmatprep.subr.bf16.mxu0 0
    %447 = vmatpush1.bf16.msra.mxu0 0
    %448 = vmatprep.subr.bf16.mxu0 0
    %449 = vmatpush1.bf16.msra.mxu0 0
    %450 = vmatprep.subr.bf16.mxu0 0
    %451 = vmatpush1.bf16.msra.mxu0 0
    %452 = vmatprep.subr.bf16.mxu0 0
    %453 = vmatpush1.bf16.msra.mxu0 0
    %454 = vmatprep.subr.bf16.mxu0 0
    %455 = vmatpush1.bf16.msra.mxu0 0
    %456 = vmatprep.subr.bf16.mxu0 0
    %457 = vmatpush1.bf16.msra.mxu0 0
    %458 = vmatprep.subr.bf16.mxu0 0
    %459 = vmatpush1.bf16.msra.mxu0 0
    %460 = vmatprep.subr.bf16.mxu0 0
    %461 = vmatpush1.bf16.msra.mxu0 %v444
    %462 = vmatprep.subr.bf16.mxu0 0
    %463 = vmatpush2.bf16.msra.mxu0 0
    %464 = vmatprep.subr.bf16.mxu0 0
    %465 = vmatpush2.bf16.msra.mxu0 0
    %466 = vmatprep.subr.bf16.mxu0 0
    %467 = vmatpush2.bf16.msra.mxu0 0
    %468 = vmatprep.subr.bf16.mxu0 0
    %469 = vmatpush2.bf16.msra.mxu0 0
    %470 = vmatprep.subr.bf16.mxu0 0
    %471 = vmatpush2.bf16.msra.mxu0 0
    %472 = vmatprep.subr.bf16.mxu0 0
    %473 = vmatpush2.bf16.msra.mxu0 0
    %474 = vmatprep.subr.bf16.mxu0 0
    %475 = vmatpush2.bf16.msra.mxu0 0
    %476 = vmatprep.subr.bf16.mxu0 0
    %477 = vmatpush2.bf16.msra.mxu0 0
    %478 = vmatprep.mubr.bf16.mxu0 0
    %479 = vmatmul.mubr.bf16.gmra.mxu0 %v441
    %v480 = vpop.f32.mrf.mxu0
    %v481 = vadd.f32 0.0, %v480
    %v482 = vpop.f32.mrf.mxu0
    %v483 = vpop.f32.mrf.mxu0
    %v484 = vpop.f32.mrf.mxu0
    %485 = vdwg.mxu0
    %v486 = vrcp.pop %v389
    %v487 = vrcp.pop %v392
    %v488 = vmul.f32 %v435, %v486
    %v489 = vmul.f32 %v481, %v487
    %v490 = vpack.c.bf16 %v489, %v488
    %v491 = vld [vmem:[#allocation7] sm:$0xf]
    %v492 = vld [vmem:[#allocation7 + $0x4] sm:$0xf]
    %v493 = vld [vmem:[#allocation7 + $0x8] sm:$0xf]
    %v494 = vld [vmem:[#allocation7 + $0xc] sm:$0xf]
    %v495 = vld [vmem:[%s4] sm:$0x1]
    %v497 = vlaneseq
    %v498 = vshrl.u32 %v497, 7
    %v499 = vsub.s32 0, %v498
    %v500 = vrot.slane %v495, %v499
    %v506 = vunpack.c.l.b16 %v491
    %v507 = vunpack.c.l.b16 %v492
    %v508 = vunpack.c.l.b16 %v493
    %v509 = vunpack.c.l.b16 %v494
    %v510 = vpack.c.b16 %v507, %v506
    %v511 = vpack.c.b16 %v509, %v508
    %v515 = vsel %vm93, %v490, 0
    %517 = vmatprep.subr.bf16.mxu0 0
    %518 = vmatpush1.bf16.msra.mxu0 0
    %519 = vmatprep.subr.bf16.mxu0 0
    %520 = vmatpush1.bf16.msra.mxu0 0
    %521 = vmatprep.subr.bf16.mxu0 0
    %522 = vmatpush1.bf16.msra.mxu0 0
    %523 = vmatprep.subr.bf16.mxu0 0
    %524 = vmatpush1.bf16.msra.mxu0 0
    %525 = vmatprep.subr.bf16.mxu0 0
    %526 = vmatpush1.bf16.msra.mxu0 0
    %527 = vmatprep.subr.bf16.mxu0 0
    %528 = vmatpush1.bf16.msra.mxu0 0
    %529 = vmatprep.subr.bf16.mxu0 0
    %530 = vmatpush1.bf16.msra.mxu0 %v511
    %531 = vmatprep.subr.bf16.mxu0 0
    %532 = vmatpush1.bf16.msra.mxu0 %v510
    %533 = vmatprep.subr.bf16.mxu0 0
    %534 = vmatpush2.bf16.msra.mxu0 0
    %535 = vmatprep.subr.bf16.mxu0 0
    %536 = vmatpush2.bf16.msra.mxu0 0
    %537 = vmatprep.subr.bf16.mxu0 0
    %538 = vmatpush2.bf16.msra.mxu0 0
    %539 = vmatprep.subr.bf16.mxu0 0
    %540 = vmatpush2.bf16.msra.mxu0 0
    %541 = vmatprep.subr.bf16.mxu0 0
    %542 = vmatpush2.bf16.msra.mxu0 0
    %543 = vmatprep.subr.bf16.mxu0 0
    %544 = vmatpush2.bf16.msra.mxu0 0
    %545 = vmatprep.subr.bf16.mxu0 0
    %546 = vmatpush2.bf16.msra.mxu0 0
    %547 = vmatprep.subr.bf16.mxu0 0
    %548 = vmatpush2.bf16.msra.mxu0 0
    %549 = vmatprep.mubr.bf16.mxu0 0
    %550 = vmatmul.mubr.bf16.gmra.mxu0 %v515
    %v551 = vpop.f32.mrf.mxu0
    %v552 = vadd.f32 %v500, %v551
    %v553 = vpop.f32.mrf.mxu0
    %v554 = vpop.f32.mrf.mxu0
    %v555 = vadd.f32 %v500, %v554
    %v556 = vpop.f32.mrf.mxu0
    %557 = vdwg.mxu0
    %v558 = vpack.c.bf16 %v555, %v552
    %v560 = vunpack.c.l.b16 %v558
    %v561 = vunpack.c.h.b16 %v558
    %v562 = vpack.c.b16 %v560, %v560
    %v563 = vpack.c.b16 %v561, %v561
    %vm566 = vcmask 257024
    %567 = vst.msk [vmem:[#allocation8] sm:$0xf] %vm566, %v562
    %568 = vst.msk [vmem:[#allocation8 + $0x4] sm:$0xf] %vm566, %v563
    // Predicated region
    $region34: #{tpu_custom_call.1} parent=1 // pred_check
      _
    $region35: #{tpu_custom_call.1} parent=1 // pred_check_branch
      %570 = sbr.rel (0) target = $region37
    $region36: #{tpu_custom_call.1} parent=1 // pred_region
      %s572 = ssub.s32 128, 128
      %573 = vsyncadd [#allocation4], %s572
      %s574 = sshll.u32 [#allocation8], 4
      %s575 = int_to_ptr.vmem [resolvable:$true] %s574
      %580 = dma.vmem_to_hbm [thread:$0]  %s575, 128, %s5, [#allocation4], 64, 64, 4
    $region37: #{tpu_custom_call.1} parent=1 // pred_fallthru
      _
    // Predicated region
    $region38: #{tpu_custom_call.1} parent=1 // pred_check
      _
    $region39: #{tpu_custom_call.1} parent=1 // pred_check_branch
      %582 = sbr.rel (0) target = $region41
    $region40: #{tpu_custom_call.1} parent=1 // pred_region
      %583 = dma.done [#allocation4], 128
    $region41: #{tpu_custom_call.1} parent=1 // pred_fallthru
      _
    %584 = vsyncpa [#allocation3], 1
    %585 = vsyncpa [#allocation6], 1
    %586 = vsyncpa [#allocation4], 1

</llo_original>
